<compile_context>
chip_gen: v5e
topology: v5e:2x2
jax: 0.10.0
libtpu: 0.0.40
codegen_flags: <defaults>
</compile_context>

<pallas_src>
import math

import jax
import jax.numpy as jnp
from jax import lax
from jax.experimental import pallas as pl
from jax.experimental.pallas import tpu as pltpu


# ---------------- float32 error-free transforms & range reduction ----------
_SPLIT = 4097.0                       # 2**12 + 1 (Dekker split for f32)
_TWO_PI_HI = 6.28125                  # 8-bit mantissa -> k*hi exact for k < 2^16
_TWO_PI_LO = 2.0 * math.pi - 6.28125
_INV_TWO_PI = 1.0 / (2.0 * math.pi)


def _two_prod(a, b):
    """a*b = p + err exactly (no FMA needed), float32."""
    p = a * b
    ca = _SPLIT * a
    a_hi = ca - (ca - a)
    a_lo = a - a_hi
    cb = _SPLIT * b
    b_hi = cb - (cb - b)
    b_lo = b - b_hi
    err = ((a_hi * b_hi - p) + a_hi * b_lo + a_lo * b_hi) + a_lo * b_lo
    return p, err


def _two_sum(a, b):
    """a+b = s + err exactly (Knuth)."""
    s = a + b
    bb = s - a
    err = (a - (s - bb)) + (b - bb)
    return s, err


def _reduce_2pi(x):
    """x - 2*pi*round(x/2pi) via two-constant Cody-Waite (keeps |x| <~ pi)."""
    k = jnp.floor(x * jnp.float32(_INV_TWO_PI) + 0.5)
    return (x - k * jnp.float32(_TWO_PI_HI)) - k * jnp.float32(_TWO_PI_LO)


def _sincos_compensated(x_hi, x_lo):
    """sin/cos of (x_hi + x_lo) with |x_lo| << 1, first-order compensation."""
    xr = _reduce_2pi(x_hi)
    s = jnp.sin(xr)
    c = jnp.cos(xr)
    return s + x_lo * c, c - x_lo * s


# --------------------------------- kernel ----------------------------------
def _make_kernel(tn, dt, t0):
    gpt = tn // 128  # lane groups per time tile

    def kernel(c2_ref, omega_ref, phase_ref, hc_ref, hp_ref,
               sd_ref, cd_ref, tsq_ref, cross_ref, plus_ref):
        j = pl.program_id(1)

        c2 = c2_ref[...]          # (tb, 1)  -omega^2 / (2 q^2)
        omega = omega_ref[...]    # (tb, 1)
        phase = phase_ref[...]    # (tb, 1)
        hc = hc_ref[...]          # (tb, 1)
        hp = hp_ref[...]          # (tb, 1)
        sd = sd_ref[...]          # (tb, 128)  sin(omega * l*dt), l = 0..127
        cd = cd_ref[...]          # (tb, 128)  cos(omega * l*dt)

        # Carrier phase at each 128-lane group's first sample:
        #   A[b, g] = omega[b] * t_base[g] - phase[b]
        # computed with compensation so sA*cD + cA*sD below reproduces
        # sin(omega*t - phase) to ~ulp even for |omega*t_base| of O(100) rad.
        g_row = lax.broadcasted_iota(jnp.int32, (1, gpt), 1).astype(jnp.float32)
        nbase = (j * tn).astype(jnp.float32) + g_row * 128.0
        tbase = nbase * jnp.float32(dt) + jnp.float32(t0)        # (1, gpt)

        prod, e1 = _two_prod(omega, tbase)                        # (tb, gpt)
        a, e2 = _two_sum(prod, -phase)
        sin_a, cos_a = _sincos_compensated(a, e1 + e2)

        # Fold the per-batch amplitudes into the tiny per-group factors.
        sac = sin_a * hc
        cac = cos_a * hc
        sap = sin_a * hp
        cap = cos_a * hp

        # One 128-lane group (one vreg width) per iteration: everything below
        # is plain row/column broadcasts + elementwise VPU work + one exp.
        for g in range(gpt):
            sl = slice(g * 128, (g + 1) * 128)
            env = jnp.exp(c2 * tsq_ref[:, sl])                    # (tb, 128)
            sac_g = sac[:, g:g + 1]
            cac_g = cac[:, g:g + 1]
            sap_g = sap[:, g:g + 1]
            cap_g = cap[:, g:g + 1]
            cross_ref[:, sl] = env * (sac_g * cd + cac_g * sd)    # h0c*env*sin
            plus_ref[:, sl] = env * (cap_g * cd - sap_g * sd)     # h0p*env*cos

    return kernel


# --------------------------------- wrapper ---------------------------------
def _round_up(x, m):
    return ((x + m - 1) // m) * m


def _plan_tiles(batch, n, tb_target, tn_target):
    tb_target = max(8, (int(tb_target) // 8) * 8)
    tn_target = max(128, (int(tn_target) // 128) * 128)
    tb = min(tb_target, _round_up(batch, 8))
    tn = min(tn_target, _round_up(n, 128))
    b_pad = _round_up(batch, tb)
    n_pad = _round_up(n, tn)
    # v7x has two TensorCores: when the whole problem fits a single program,
    # split one "parallel" axis in two (only when it costs zero extra padding).
    if (b_pad // tb) * (n_pad // tn) == 1:
        if n_pad >= 256 and n_pad % 256 == 0:
            tn = n_pad // 2
        elif b_pad >= 16 and b_pad % 16 == 0:
            tb = b_pad // 2
    return tb, tn, b_pad, n_pad


def sine_gaussian(quality, frequency, hrss, phase, eccentricity,
                  *, sample_rate, duration, tb_target=128, tn_target=8192):
    """ml4gw SineGaussian forward.  Returns (cross, plus), each (B, N) f32."""
    batch = int(frequency.shape[0])
    num = int(duration * sample_rate)
    dt = 1.0 / float(sample_rate)
    t0 = -float(duration) / 2.0
    f32 = jnp.float32

    def col(x):
        return x.astype(f32).reshape(batch, 1)

    q = col(quality)
    f = col(frequency)
    h = col(hrss)
    p = col(phase)
    e = col(eccentricity)

    # ---- per-batch setup (O(B), hoisted out of the Pallas hot path) ----
    pi = f32(math.pi)
    a = 1.0 / jnp.sqrt(2.0 - e * e)              # semi_major_minor_from_e
    b = a * jnp.sqrt(1.0 - e * e)
    norm_prefactor = q / (4.0 * f * jnp.sqrt(pi))
    exp_mq2 = jnp.exp(-q * q)
    cosine_norm = norm_prefactor * (1.0 + exp_mq2)
    sine_norm = norm_prefactor * (1.0 - exp_mq2)
    cp = jnp.cos(p)
    sp = jnp.sin(p)
    h0_plus = h * a / jnp.sqrt(cosine_norm * cp * cp + sine_norm * sp * sp)
    h0_cross = h * b / jnp.sqrt(cosine_norm * sp * sp + sine_norm * cp * cp)
    omega = 2.0 * pi * f                          # (B, 1)
    c2 = -(omega * omega) / (2.0 * q * q)         # (B, 1)

    # Lane-offset rotations sin/cos(omega * l*dt), l = 0..127 (compensated).
    dl = (jnp.arange(128, dtype=f32) * f32(dt)).reshape(1, 128)
    dprod, derr = _two_prod(omega, dl)
    sin_d, cos_d = _sincos_compensated(dprod, derr)               # (B, 128)

    # Uniform time grid (same construction as the module) and t^2 row.
    times = jnp.arange(num, dtype=f32) / f32(sample_rate) - f32(duration / 2.0)
    tsq = (times * times).reshape(1, num)

    # ---- tiling / padding ----
    tb, tn, b_pad, n_pad = _plan_tiles(batch, num, tb_target, tn_target)

    def pad_rows(x):  # pad with zeros: padded rows produce finite zeros
        return jnp.pad(x, ((0, b_pad - batch), (0, 0)))

    c2_p = pad_rows(c2)
    omega_p = pad_rows(omega)
    phase_p = pad_rows(p)
    hc_p = pad_rows(h0_cross)
    hp_p = pad_rows(h0_plus)
    sd_p = pad_rows(sin_d)
    cd_p = pad_rows(cos_d)
    tsq_p = jnp.pad(tsq, ((0, 0), (0, n_pad - num)))

    grid = (b_pad // tb, n_pad // tn)  # time axis innermost: param columns /
    #                                    sin_d/cos_d keep block index (i, 0)
    #                                    across the inner sweep -> no re-DMA.
    col_spec = pl.BlockSpec((tb, 1), lambda i, j: (i, 0))
    d_spec = pl.BlockSpec((tb, 128), lambda i, j: (i, 0))
    tsq_spec = pl.BlockSpec((1, tn), lambda i, j: (0, j))
    out_spec = pl.BlockSpec((tb, tn), lambda i, j: (i, j))

    # VMEM budget: double-buffered outputs dominate; small-width inputs pad
    # to 128 lanes in VMEM.  (No double counting; headroom for spill/scratch.)
    out_buf = 2 * 2 * tb * tn * 4
    in_buf = 2 * tn * 4 + 2 * 7 * tb * 128 * 4
    vmem_limit = int(min(max(32 << 20, out_buf + in_buf + (16 << 20)), 56 << 20))

    kernel = _make_kernel(tn, dt, t0)
    cross, plus = pl.pallas_call(
        kernel,
        out_shape=(jax.ShapeDtypeStruct((b_pad, n_pad), f32),
                   jax.ShapeDtypeStruct((b_pad, n_pad), f32)),
        grid_spec=pltpu.PrefetchScalarGridSpec(
            num_scalar_prefetch=0,
            grid=grid,
            in_specs=[col_spec, col_spec, col_spec, col_spec, col_spec,
                      d_spec, d_spec, tsq_spec],
            out_specs=[out_spec, out_spec],
        ),
        compiler_params=pltpu.CompilerParams(
            dimension_semantics=("parallel", "parallel"),
            vmem_limit_bytes=vmem_limit,
        ),
    )(c2_p, omega_p, phase_p, hc_p, hp_p, sd_p, cd_p, tsq_p)

    return cross[:batch, :num], plus[:batch, :num]


# ------------------------------- reference ---------------------------------
def _reference(quality, frequency, hrss, phase, eccentricity,
               *, sample_rate, duration):
    """Pure-JAX (float32) mirror of the PyTorch forward."""
    f32 = jnp.float32
    num = int(duration * sample_rate)
    t = jnp.arange(num, dtype=f32) / f32(sample_rate) - f32(duration / 2.0)

    f = frequency.reshape(-1, 1).astype(f32)
    q = quality.reshape(-1, 1).astype(f32)
    h = hrss.reshape(-1, 1).astype(f32)
    p = phase.reshape(-1, 1).astype(f32)
    e = eccentricity.reshape(-1, 1).astype(f32)

    a = 1.0 / jnp.sqrt(2.0 - e * e)
    b = a * jnp.sqrt(1.0 - e * e)
    norm_prefactor = q / (4.0 * f * jnp.sqrt(f32(math.pi)))
    cosine_norm = norm_prefactor * (1.0 + jnp.exp(-q * q))
    sine_norm = norm_prefactor * (1.0 - jnp.exp(-q * q))
    cp, sp = jnp.cos(p), jnp.sin(p)
    h0_plus = h * a / jnp.sqrt(cosine_norm * cp ** 2 + sine_norm * sp ** 2)
    h0_cross = h * b / jnp.sqrt(cosine_norm * sp ** 2 + sine_norm * cp ** 2)
    phi = 2.0 * f32(math.pi) * f * t
    env = jnp.exp(phi ** 2 / (-2.0 * q ** 2))
    cross = env * jnp.sin(phi - p) * h0_cross
    plus = env * jnp.cos(phi - p) * h0_plus
    return cross, plus


if __name__ == "__main__":
    # Module-style construction: num samples = sample_rate * duration.
    sample_rate = 128.0
    duration = 2.0
    num = int(duration * sample_rate)              # 256

    B = 8
    key = jax.random.PRNGKey(0)
    k1, k2, k3, k4, k5 = jax.random.split(key, 5)
    quality = jax.random.uniform(k1, (B,), jnp.float32, 2.0, 10.0)
    frequency = jax.random.uniform(k2, (B,), jnp.float32, 10.0, 60.0)
    hrss = jax.random.uniform(k3, (B,), jnp.float32, 0.5, 2.0)
    phase = jax.random.uniform(k4, (B,), jnp.float32, 0.0, 2.0 * math.pi)
    eccentricity = jax.random.uniform(k5, (B,), jnp.float32, 0.0, 0.9)

    cross, plus = sine_gaussian(quality, frequency, hrss, phase, eccentricity,
                                sample_rate=sample_rate, duration=duration)
    jax.block_until_ready((cross, plus))

    cross_ref, plus_ref = _reference(quality, frequency, hrss, phase,
                                     eccentricity, sample_rate=sample_rate,
                                     duration=duration)
    assert cross.shape == (B, num) and plus.shape == (B, num)
    # Angle-addition path adds a couple of ulps of rounding vs the direct
    # per-element sin/cos reference; tolerances are still tight for f32.
    assert jnp.allclose(cross, cross_ref, rtol=1e-4, atol=1e-4)
    assert jnp.allclose(plus, plus_ref, rtol=1e-4, atol=1e-4)

    print("KERNEL_OK")
</pallas_src>

<mosaic_0001>
module attributes {stable_mosaic.version = 11 : i64} {
  func.func @kernel(%arg0: i32, %arg1: i32, %arg2: memref<8x1xf32, #tpu.memory_space<vmem>>, %arg3: memref<8x1xf32, #tpu.memory_space<vmem>>, %arg4: memref<8x1xf32, #tpu.memory_space<vmem>>, %arg5: memref<8x1xf32, #tpu.memory_space<vmem>>, %arg6: memref<8x1xf32, #tpu.memory_space<vmem>>, %arg7: memref<8x128xf32, #tpu.memory_space<vmem>>, %arg8: memref<8x128xf32, #tpu.memory_space<vmem>>, %arg9: memref<1x128xf32, #tpu.memory_space<vmem>>, %arg10: memref<8x128xf32, #tpu.memory_space<vmem>>, %arg11: memref<8x128xf32, #tpu.memory_space<vmem>>) attributes {dimension_semantics = [#tpu.dimension_semantics<parallel>, #tpu.dimension_semantics<parallel>], iteration_bounds = array<i64: 1, 2>, scalar_prefetch = 0 : i64, scratch_operands = 0 : i64, tpu.core_type = #tpu.core_type<tc>, window_params = [{transform_indices = @transform_0, window_bounds = array<i64: 8, 1>}, {transform_indices = @transform_1, window_bounds = array<i64: 8, 1>}, {transform_indices = @transform_2, window_bounds = array<i64: 8, 1>}, {transform_indices = @transform_3, window_bounds = array<i64: 8, 1>}, {transform_indices = @transform_4, window_bounds = array<i64: 8, 1>}, {transform_indices = @transform_5, window_bounds = array<i64: 8, 128>}, {transform_indices = @transform_6, window_bounds = array<i64: 8, 128>}, {transform_indices = @transform_7, window_bounds = array<i64: 1, 128>}, {transform_indices = @transform_8, window_bounds = array<i64: 8, 128>}, {transform_indices = @transform_9, window_bounds = array<i64: 8, 128>}]} {
    %c0 = arith.constant 0 : index
    %c0_0 = arith.constant 0 : index
    %0 = vector.load %arg2[%c0, %c0_0] : memref<8x1xf32, #tpu.memory_space<vmem>>, vector<8x1xf32>
    %c0_1 = arith.constant 0 : index
    %c0_2 = arith.constant 0 : index
    %1 = vector.load %arg3[%c0_1, %c0_2] : memref<8x1xf32, #tpu.memory_space<vmem>>, vector<8x1xf32>
    %c0_3 = arith.constant 0 : index
    %c0_4 = arith.constant 0 : index
    %2 = vector.load %arg4[%c0_3, %c0_4] : memref<8x1xf32, #tpu.memory_space<vmem>>, vector<8x1xf32>
    %c0_5 = arith.constant 0 : index
    %c0_6 = arith.constant 0 : index
    %3 = vector.load %arg5[%c0_5, %c0_6] : memref<8x1xf32, #tpu.memory_space<vmem>>, vector<8x1xf32>
    %c0_7 = arith.constant 0 : index
    %c0_8 = arith.constant 0 : index
    %4 = vector.load %arg6[%c0_7, %c0_8] : memref<8x1xf32, #tpu.memory_space<vmem>>, vector<8x1xf32>
    %c0_9 = arith.constant 0 : index
    %c0_10 = arith.constant 0 : index
    %5 = vector.load %arg7[%c0_9, %c0_10] : memref<8x128xf32, #tpu.memory_space<vmem>>, vector<8x128xf32>
    %c0_11 = arith.constant 0 : index
    %c0_12 = arith.constant 0 : index
    %6 = vector.load %arg8[%c0_11, %c0_12] : memref<8x128xf32, #tpu.memory_space<vmem>>, vector<8x128xf32>
    %7 = tpu.iota {dimensions = array<i32: 1>} : vector<1x1xi32>
    %8 = arith.sitofp %7 : vector<1x1xi32> to vector<1x1xf32>
    %c128_i32 = arith.constant 128 : i32
    %9 = arith.muli %arg1, %c128_i32 : i32
    %10 = arith.sitofp %9 : i32 to f32
    %cst = arith.constant 1.280000e+02 : f32
    %11 = vector.broadcast %cst : f32 to vector<1x1xf32>
    %12 = arith.mulf %8, %11 : vector<1x1xf32>
    %13 = vector.broadcast %10 : f32 to vector<1x1xf32>
    %14 = arith.addf %13, %12 : vector<1x1xf32>
    %cst_13 = arith.constant 7.812500e-03 : f32
    %15 = vector.broadcast %cst_13 : f32 to vector<1x1xf32>
    %16 = arith.mulf %14, %15 : vector<1x1xf32>
    %cst_14 = arith.constant -1.000000e+00 : f32
    %17 = vector.broadcast %cst_14 : f32 to vector<1x1xf32>
    %18 = arith.addf %16, %17 : vector<1x1xf32>
    %19 = vector.broadcast %18 : vector<1x1xf32> to vector<8x1xf32>
    %20 = arith.mulf %1, %19 : vector<8x1xf32>
    %cst_15 = arith.constant 4.097000e+03 : f32
    %21 = vector.broadcast %cst_15 : f32 to vector<8x1xf32>
    %22 = arith.mulf %21, %1 : vector<8x1xf32>
    %23 = arith.subf %22, %1 : vector<8x1xf32>
    %24 = arith.subf %22, %23 : vector<8x1xf32>
    %25 = arith.subf %1, %24 : vector<8x1xf32>
    %cst_16 = arith.constant 4.097000e+03 : f32
    %26 = vector.broadcast %cst_16 : f32 to vector<1x1xf32>
    %27 = arith.mulf %26, %18 : vector<1x1xf32>
    %28 = arith.subf %27, %18 : vector<1x1xf32>
    %29 = arith.subf %27, %28 : vector<1x1xf32>
    %30 = arith.subf %18, %29 : vector<1x1xf32>
    %31 = vector.broadcast %29 : vector<1x1xf32> to vector<8x1xf32>
    %32 = arith.mulf %24, %31 : vector<8x1xf32>
    %33 = arith.subf %32, %20 : vector<8x1xf32>
    %34 = vector.broadcast %30 : vector<1x1xf32> to vector<8x1xf32>
    %35 = arith.mulf %24, %34 : vector<8x1xf32>
    %36 = arith.addf %33, %35 : vector<8x1xf32>
    %37 = vector.broadcast %29 : vector<1x1xf32> to vector<8x1xf32>
    %38 = arith.mulf %25, %37 : vector<8x1xf32>
    %39 = arith.addf %36, %38 : vector<8x1xf32>
    %40 = vector.broadcast %30 : vector<1x1xf32> to vector<8x1xf32>
    %41 = arith.mulf %25, %40 : vector<8x1xf32>
    %42 = arith.addf %39, %41 : vector<8x1xf32>
    %cst_17 = arith.constant 0.000000e+00 : f32
    %43 = vector.broadcast %cst_17 : f32 to vector<8x1xf32>
    %44 = arith.subf %43, %2 : vector<8x1xf32>
    %45 = arith.addf %20, %44 : vector<8x1xf32>
    %46 = arith.subf %45, %20 : vector<8x1xf32>
    %47 = arith.subf %45, %46 : vector<8x1xf32>
    %48 = arith.subf %20, %47 : vector<8x1xf32>
    %49 = arith.subf %44, %46 : vector<8x1xf32>
    %50 = arith.addf %48, %49 : vector<8x1xf32>
    %51 = arith.addf %42, %50 : vector<8x1xf32>
    %cst_18 = arith.constant 0.159154937 : f32
    %52 = vector.broadcast %cst_18 : f32 to vector<8x1xf32>
    %53 = arith.mulf %45, %52 : vector<8x1xf32>
    %cst_19 = arith.constant 5.000000e-01 : f32
    %54 = vector.broadcast %cst_19 : f32 to vector<8x1xf32>
    %55 = arith.addf %53, %54 : vector<8x1xf32>
    %56 = math.floor %55 : vector<8x1xf32>
    %cst_20 = arith.constant 6.281250e+00 : f32
    %57 = vector.broadcast %cst_20 : f32 to vector<8x1xf32>
    %58 = arith.mulf %56, %57 : vector<8x1xf32>
    %59 = arith.subf %45, %58 : vector<8x1xf32>
    %cst_21 = arith.constant 0.00193530717 : f32
    %60 = vector.broadcast %cst_21 : f32 to vector<8x1xf32>
    %61 = arith.mulf %56, %60 : vector<8x1xf32>
    %62 = arith.subf %59, %61 : vector<8x1xf32>
    %63 = math.sin %62 : vector<8x1xf32>
    %64 = math.cos %62 : vector<8x1xf32>
    %65 = arith.mulf %51, %64 : vector<8x1xf32>
    %66 = arith.addf %63, %65 : vector<8x1xf32>
    %67 = arith.mulf %51, %63 : vector<8x1xf32>
    %68 = arith.subf %64, %67 : vector<8x1xf32>
    %69 = arith.mulf %66, %3 : vector<8x1xf32>
    %70 = arith.mulf %68, %3 : vector<8x1xf32>
    %71 = arith.mulf %66, %4 : vector<8x1xf32>
    %72 = arith.mulf %68, %4 : vector<8x1xf32>
    %c0_22 = arith.constant 0 : index
    %c0_23 = arith.constant 0 : index
    %73 = vector.load %arg9[%c0_22, %c0_23] : memref<1x128xf32, #tpu.memory_space<vmem>>, vector<1x128xf32>
    %74 = vector.broadcast %0 : vector<8x1xf32> to vector<8x128xf32>
    %75 = vector.broadcast %73 : vector<1x128xf32> to vector<8x128xf32>
    %76 = arith.mulf %74, %75 : vector<8x128xf32>
    %77 = math.exp %76 : vector<8x128xf32>
    %78 = vector.broadcast %69 : vector<8x1xf32> to vector<8x128xf32>
    %79 = arith.mulf %78, %6 : vector<8x128xf32>
    %80 = vector.broadcast %70 : vector<8x1xf32> to vector<8x128xf32>
    %81 = arith.mulf %80, %5 : vector<8x128xf32>
    %82 = arith.addf %79, %81 : vector<8x128xf32>
    %83 = arith.mulf %77, %82 : vector<8x128xf32>
    %c0_24 = arith.constant 0 : index
    %c0_25 = arith.constant 0 : index
    %84 = vector.load %arg10[%c0_24, %c0_25] : memref<8x128xf32, #tpu.memory_space<vmem>>, vector<8x128xf32>
    tpu.vector_store %arg10[%c0_24, %c0_25], %83 {strides = array<i32>} : memref<8x128xf32, #tpu.memory_space<vmem>>, vector<8x128xf32>,
    %85 = vector.broadcast %72 : vector<8x1xf32> to vector<8x128xf32>
    %86 = arith.mulf %85, %6 : vector<8x128xf32>
    %87 = vector.broadcast %71 : vector<8x1xf32> to vector<8x128xf32>
    %88 = arith.mulf %87, %5 : vector<8x128xf32>
    %89 = arith.subf %86, %88 : vector<8x128xf32>
    %90 = arith.mulf %77, %89 : vector<8x128xf32>
    %c0_26 = arith.constant 0 : index
    %c0_27 = arith.constant 0 : index
    %91 = vector.load %arg11[%c0_26, %c0_27] : memref<8x128xf32, #tpu.memory_space<vmem>>, vector<8x128xf32>
    tpu.vector_store %arg11[%c0_26, %c0_27], %90 {strides = array<i32>} : memref<8x128xf32, #tpu.memory_space<vmem>>, vector<8x128xf32>,
    return
  }
  func.func @transform_0(%arg0: i32, %arg1: i32) -> (i32, i32) {
    %c0_i32 = arith.constant 0 : i32
    %c0_i32_0 = arith.constant 0 : i32
    return %arg0, %c0_i32 : i32, i32
  }
  func.func @transform_1(%arg0: i32, %arg1: i32) -> (i32, i32) {
    %c0_i32 = arith.constant 0 : i32
    %c0_i32_0 = arith.constant 0 : i32
    return %arg0, %c0_i32 : i32, i32
  }
  func.func @transform_2(%arg0: i32, %arg1: i32) -> (i32, i32) {
    %c0_i32 = arith.constant 0 : i32
    %c0_i32_0 = arith.constant 0 : i32
    return %arg0, %c0_i32 : i32, i32
  }
  func.func @transform_3(%arg0: i32, %arg1: i32) -> (i32, i32) {
    %c0_i32 = arith.constant 0 : i32
    %c0_i32_0 = arith.constant 0 : i32
    return %arg0, %c0_i32 : i32, i32
  }
  func.func @transform_4(%arg0: i32, %arg1: i32) -> (i32, i32) {
    %c0_i32 = arith.constant 0 : i32
    %c0_i32_0 = arith.constant 0 : i32
    return %arg0, %c0_i32 : i32, i32
  }
  func.func @transform_5(%arg0: i32, %arg1: i32) -> (i32, i32) {
    %c0_i32 = arith.constant 0 : i32
    %c0_i32_0 = arith.constant 0 : i32
    return %arg0, %c0_i32 : i32, i32
  }
  func.func @transform_6(%arg0: i32, %arg1: i32) -> (i32, i32) {
    %c0_i32 = arith.constant 0 : i32
    %c0_i32_0 = arith.constant 0 : i32
    return %arg0, %c0_i32 : i32, i32
  }
  func.func @transform_7(%arg0: i32, %arg1: i32) -> (i32, i32) {
    %c0_i32 = arith.constant 0 : i32
    %c0_i32_0 = arith.constant 0 : i32
    return %c0_i32, %arg1 : i32, i32
  }
  func.func @transform_8(%arg0: i32, %arg1: i32) -> (i32, i32) {
    %c0_i32 = arith.constant 0 : i32
    return %arg0, %arg1 : i32, i32
  }
  func.func @transform_9(%arg0: i32, %arg1: i32) -> (i32, i32) {
    %c0_i32 = arith.constant 0 : i32
    return %arg0, %arg1 : i32, i32
  }
}

</mosaic_0001>

<llo_original>
// kernel: tpu_custom_call.1
$region0: #{tpu_custom_call.1}
  #allocation0 [shape = 'u32[]', space=smem, size = 0x4, offset = 0x4, fixed_abs, tag = 'smem constant byte address 0x4 - core index']
  #allocation1 [shape = 'u32[72,128]{1,0:T(1,128)}', space=vmem, size = 0x9000, scoped, tag = 'internal scratch']
  %s0 = inlined_call_operand.vmem [shape: f32[8,1], index: 0, kind: input, shape index: {}]
  %s1 = inlined_call_operand.vmem [shape: f32[8,1], index: 1, kind: input, shape index: {}]
  %s2 = inlined_call_operand.vmem [shape: f32[8,1], index: 2, kind: input, shape index: {}]
  %s3 = inlined_call_operand.vmem [shape: f32[8,1], index: 3, kind: input, shape index: {}]
  %s4 = inlined_call_operand.vmem [shape: f32[8,1], index: 4, kind: input, shape index: {}]
  %s5 = inlined_call_operand.vmem [shape: f32[8,128], index: 5, kind: input, shape index: {}]
  %s6 = inlined_call_operand.vmem [shape: f32[8,128], index: 6, kind: input, shape index: {}]
  %s7 = inlined_call_operand.vmem [shape: f32[1,256], index: 7, kind: input, shape index: {}]
  %s8 = inlined_call_operand.hbm [shape: f32[8,256], index: 8, kind: output, shape index: {0}]
  %s9 = inlined_call_operand.hbm [shape: f32[8,256], index: 9, kind: output, shape index: {1}]
  %10 = xla_tuple %s8, %s9
  %s11 = sld [smem:[#allocation0]]
  $region73: #{tpu_custom_call.1} parent=0
    _
  %s13 = ssub.s32 1, %s11
  %s14 = scalar_select 0, %s13, %s11
  $region1: #{tpu_custom_call.1} parent=0
    #allocation2 [shape = 'u8[8192]{0}', space=vmem, size = 0x2000, scoped, tag = 'output window, operand 0']
    #allocation3 [shape = 's32[2]{0}', space=sflag, size = 0x8, scoped, tag = 'scoped memory for tpu_custom_call.1']
    #allocation4 [shape = 'u8[8192]{0}', space=vmem, size = 0x2000, scoped, tag = 'output window, operand 1']
    #allocation5 [shape = 's32[2]{0}', space=sflag, size = 0x8, scoped, tag = 'scoped memory for tpu_custom_call.1']
    %15 = vsyncpa [#allocation3], 0
    %s16 = scalar_lea.sflag [#allocation3], 1
    %17 = vsyncpa %s16, 0
    %18 = vsyncpa [#allocation5], 0
    %s19 = scalar_lea.sflag [#allocation5], 1
    %20 = vsyncpa %s19, 0
    loop: start=0, step=1, limit=4
    $region2: #{tpu_custom_call.1} parent=1 // loop_pre_header
      _
    $region3: #{tpu_custom_call.1} parent=1 // loop_header
      %s22 = sphi 0, %s26
      %p23 = scmp.ge.s32.totalorder %s22, 4
      %s29 = sphi 0, %s41
      %s30 = sphi 0, %s37
      %s31 = sphi 0, %s29
      %s32 = sphi 0, %s30
      %s33 = sphi 0, %s31
      %s34 = sphi 0, %s32
      %s44 = sphi 0, %s46
      %s47 = sphi 0, %s44
      %s48 = sphi 0, %s47
      %s64 = sphi 0, %s48
      %s70 = sphi 0, %s72
      %s73 = sphi 0, %s70
      %s74 = sphi 0, %s73
      %s90 = sphi 0, %s74
      %s96 = sphi 0, %s98
      %s99 = sphi 0, %s96
      %s100 = sphi 0, %s99
      %s116 = sphi 0, %s100
      %s122 = sphi 0, %s124
      %s125 = sphi 0, %s122
      %s126 = sphi 0, %s125
      %s142 = sphi 0, %s126
      %s148 = sphi 0, %s150
      %s151 = sphi 0, %s148
      %s152 = sphi 0, %s151
      %s168 = sphi 0, %s152
      %s174 = sphi 0, %s176
      %s177 = sphi 0, %s174
      %s178 = sphi 0, %s177
      %s194 = sphi 0, %s178
      %s200 = sphi 0, %s202
      %s203 = sphi 0, %s200
      %s204 = sphi 0, %s203
      %s220 = sphi 0, %s204
      %s226 = sphi 0, %s228
      %s229 = sphi 0, %s226
      %s230 = sphi 0, %s229
      %s246 = sphi 0, %s230
      %s254 = sphi 0, %s256
      %s257 = sphi 0, %s254
      %s258 = sphi 0, %s257
      %s274 = sphi 0, %s258
      %s282 = sphi 0, %s284
      %s285 = sphi 0, %s282
      %s286 = sphi 0, %s285
      %s302 = sphi 0, %s286
    $region4: #{tpu_custom_call.1} parent=1 // loop_header_branch
      %25 = sbr.rel (%p23) target = $region8
    $region5: #{tpu_custom_call.1} parent=1 // loop_body
      %s27 = ssub.s32 %s22, 1
      %s28 = ssub.s32 %s22, 2
      %s35 = sadd.s32 1, %s30
      %p36 = scmp.ge.s32.totalorder %s35, 2
      %s37 = scalar_select %p36, 0, %s35
      %s38 = sadd.s32 1, %s29
      %s39 = scalar_select %p36, %s38, %s29
      %p40 = scmp.ge.s32.totalorder %s39, 1
      %s41 = scalar_select %p40, 0, %s39
      %s42 = ssub.s32 %s29, %s41
      %p43 = scmp.eq.s32.totalorder %s42, 0
      %s45 = sadd.s32 %s44, 1
      %s46 = scalar_select %p43, %s44, %s45
      %p49 = pneg %p43
      %p50 = scmp.eq.s32.totalorder %s22, 1
      %p51 = por %p49, %p50
      %p52 = scmp.ne.s32.totalorder %s44, %s47
      %p53 = scmp.eq.s32.totalorder %s22, 0
      %p54 = por %p52, %p53
      %p55 = scmp.ne.s32.totalorder %s44, %s47
      %p56 = scmp.eq.s32.totalorder %s27, 1
      %p57 = por %p55, %p56
      %p58 = scmp.ne.s32.totalorder %s47, %s48
      %p59 = scmp.eq.s32.totalorder %s27, 0
      %p60 = por %p58, %p59
      %p61 = scmp.ne.s32.totalorder %s47, %s48
      %p62 = scmp.eq.s32.totalorder %s28, 1
      %p63 = por %p61, %p62
      %p65 = scmp.ne.s32.totalorder %s48, %s64
      %p66 = scmp.eq.s32.totalorder %s28, 0
      %p67 = por %p65, %p66
      %s68 = ssub.s32 %s29, %s41
      %p69 = scmp.eq.s32.totalorder %s68, 0
      %s71 = sadd.s32 %s70, 1
      %s72 = scalar_select %p69, %s70, %s71
      %p75 = pneg %p69
      %p76 = scmp.eq.s32.totalorder %s22, 1
      %p77 = por %p75, %p76
      %p78 = scmp.ne.s32.totalorder %s70, %s73
      %p79 = scmp.eq.s32.totalorder %s22, 0
      %p80 = por %p78, %p79
      %p81 = scmp.ne.s32.totalorder %s70, %s73
      %p82 = scmp.eq.s32.totalorder %s27, 1
      %p83 = por %p81, %p82
      %p84 = scmp.ne.s32.totalorder %s73, %s74
      %p85 = scmp.eq.s32.totalorder %s27, 0
      %p86 = por %p84, %p85
      %p87 = scmp.ne.s32.totalorder %s73, %s74
      %p88 = scmp.eq.s32.totalorder %s28, 1
      %p89 = por %p87, %p88
      %p91 = scmp.ne.s32.totalorder %s74, %s90
      %p92 = scmp.eq.s32.totalorder %s28, 0
      %p93 = por %p91, %p92
      %s94 = ssub.s32 %s29, %s41
      %p95 = scmp.eq.s32.totalorder %s94, 0
      %s97 = sadd.s32 %s96, 1
      %s98 = scalar_select %p95, %s96, %s97
      %p101 = pneg %p95
      %p102 = scmp.eq.s32.totalorder %s22, 1
      %p103 = por %p101, %p102
      %p104 = scmp.ne.s32.totalorder %s96, %s99
      %p105 = scmp.eq.s32.totalorder %s22, 0
      %p106 = por %p104, %p105
      %p107 = scmp.ne.s32.totalorder %s96, %s99
      %p108 = scmp.eq.s32.totalorder %s27, 1
      %p109 = por %p107, %p108
      %p110 = scmp.ne.s32.totalorder %s99, %s100
      %p111 = scmp.eq.s32.totalorder %s27, 0
      %p112 = por %p110, %p111
      %p113 = scmp.ne.s32.totalorder %s99, %s100
      %p114 = scmp.eq.s32.totalorder %s28, 1
      %p115 = por %p113, %p114
      %p117 = scmp.ne.s32.totalorder %s100, %s116
      %p118 = scmp.eq.s32.totalorder %s28, 0
      %p119 = por %p117, %p118
      %s120 = ssub.s32 %s29, %s41
      %p121 = scmp.eq.s32.totalorder %s120, 0
      %s123 = sadd.s32 %s122, 1
      %s124 = scalar_select %p121, %s122, %s123
      %p127 = pneg %p121
      %p128 = scmp.eq.s32.totalorder %s22, 1
      %p129 = por %p127, %p128
      %p130 = scmp.ne.s32.totalorder %s122, %s125
      %p131 = scmp.eq.s32.totalorder %s22, 0
      %p132 = por %p130, %p131
      %p133 = scmp.ne.s32.totalorder %s122, %s125
      %p134 = scmp.eq.s32.totalorder %s27, 1
      %p135 = por %p133, %p134
      %p136 = scmp.ne.s32.totalorder %s125, %s126
      %p137 = scmp.eq.s32.totalorder %s27, 0
      %p138 = por %p136, %p137
      %p139 = scmp.ne.s32.totalorder %s125, %s126
      %p140 = scmp.eq.s32.totalorder %s28, 1
      %p141 = por %p139, %p140
      %p143 = scmp.ne.s32.totalorder %s126, %s142
      %p144 = scmp.eq.s32.totalorder %s28, 0
      %p145 = por %p143, %p144
      %s146 = ssub.s32 %s29, %s41
      %p147 = scmp.eq.s32.totalorder %s146, 0
      %s149 = sadd.s32 %s148, 1
      %s150 = scalar_select %p147, %s148, %s149
      %p153 = pneg %p147
      %p154 = scmp.eq.s32.totalorder %s22, 1
      %p155 = por %p153, %p154
      %p156 = scmp.ne.s32.totalorder %s148, %s151
      %p157 = scmp.eq.s32.totalorder %s22, 0
      %p158 = por %p156, %p157
      %p159 = scmp.ne.s32.totalorder %s148, %s151
      %p160 = scmp.eq.s32.totalorder %s27, 1
      %p161 = por %p159, %p160
      %p162 = scmp.ne.s32.totalorder %s151, %s152
      %p163 = scmp.eq.s32.totalorder %s27, 0
      %p164 = por %p162, %p163
      %p165 = scmp.ne.s32.totalorder %s151, %s152
      %p166 = scmp.eq.s32.totalorder %s28, 1
      %p167 = por %p165, %p166
      %p169 = scmp.ne.s32.totalorder %s152, %s168
      %p170 = scmp.eq.s32.totalorder %s28, 0
      %p171 = por %p169, %p170
      %s172 = ssub.s32 %s29, %s41
      %p173 = scmp.eq.s32.totalorder %s172, 0
      %s175 = sadd.s32 %s174, 1
      %s176 = scalar_select %p173, %s174, %s175
      %p179 = pneg %p173
      %p180 = scmp.eq.s32.totalorder %s22, 1
      %p181 = por %p179, %p180
      %p182 = scmp.ne.s32.totalorder %s174, %s177
      %p183 = scmp.eq.s32.totalorder %s22, 0
      %p184 = por %p182, %p183
      %p185 = scmp.ne.s32.totalorder %s174, %s177
      %p186 = scmp.eq.s32.totalorder %s27, 1
      %p187 = por %p185, %p186
      %p188 = scmp.ne.s32.totalorder %s177, %s178
      %p189 = scmp.eq.s32.totalorder %s27, 0
      %p190 = por %p188, %p189
      %p191 = scmp.ne.s32.totalorder %s177, %s178
      %p192 = scmp.eq.s32.totalorder %s28, 1
      %p193 = por %p191, %p192
      %p195 = scmp.ne.s32.totalorder %s178, %s194
      %p196 = scmp.eq.s32.totalorder %s28, 0
      %p197 = por %p195, %p196
      %s198 = ssub.s32 %s29, %s41
      %p199 = scmp.eq.s32.totalorder %s198, 0
      %s201 = sadd.s32 %s200, 1
      %s202 = scalar_select %p199, %s200, %s201
      %p205 = pneg %p199
      %p206 = scmp.eq.s32.totalorder %s22, 1
      %p207 = por %p205, %p206
      %p208 = scmp.ne.s32.totalorder %s200, %s203
      %p209 = scmp.eq.s32.totalorder %s22, 0
      %p210 = por %p208, %p209
      %p211 = scmp.ne.s32.totalorder %s200, %s203
      %p212 = scmp.eq.s32.totalorder %s27, 1
      %p213 = por %p211, %p212
      %p214 = scmp.ne.s32.totalorder %s203, %s204
      %p215 = scmp.eq.s32.totalorder %s27, 0
      %p216 = por %p214, %p215
      %p217 = scmp.ne.s32.totalorder %s203, %s204
      %p218 = scmp.eq.s32.totalorder %s28, 1
      %p219 = por %p217, %p218
      %p221 = scmp.ne.s32.totalorder %s204, %s220
      %p222 = scmp.eq.s32.totalorder %s28, 0
      %p223 = por %p221, %p222
      %s224 = ssub.s32 %s30, %s37
      %p225 = scmp.eq.s32.totalorder %s224, 0
      %s227 = sadd.s32 %s226, 1
      %s228 = scalar_select %p225, %s226, %s227
      %p231 = pneg %p225
      %p232 = scmp.eq.s32.totalorder %s22, 1
      %p233 = por %p231, %p232
      %p234 = scmp.ne.s32.totalorder %s226, %s229
      %p235 = scmp.eq.s32.totalorder %s22, 0
      %p236 = por %p234, %p235
      %p237 = scmp.ne.s32.totalorder %s226, %s229
      %p238 = scmp.eq.s32.totalorder %s27, 1
      %p239 = por %p237, %p238
      %p240 = scmp.ne.s32.totalorder %s229, %s230
      %p241 = scmp.eq.s32.totalorder %s27, 0
      %p242 = por %p240, %p241
      %p243 = scmp.ne.s32.totalorder %s229, %s230
      %p244 = scmp.eq.s32.totalorder %s28, 1
      %p245 = por %p243, %p244
      %p247 = scmp.ne.s32.totalorder %s230, %s246
      %p248 = scmp.eq.s32.totalorder %s28, 0
      %p249 = por %p247, %p248
      %s250 = ssub.s32 %s29, %s41
      %s251 = ssub.s32 %s30, %s37
      %s252 = sor.u32 %s250, %s251
      %p253 = scmp.eq.s32.totalorder %s252, 0
      %s255 = sadd.s32 %s254, 1
      %s256 = scalar_select %p253, %s254, %s255
      %p259 = pneg %p253
      %p260 = scmp.eq.s32.totalorder %s22, 1
      %p261 = por %p259, %p260
      %p262 = scmp.ne.s32.totalorder %s254, %s257
      %p263 = scmp.eq.s32.totalorder %s22, 0
      %p264 = por %p262, %p263
      %p265 = scmp.ne.s32.totalorder %s254, %s257
      %p266 = scmp.eq.s32.totalorder %s27, 1
      %p267 = por %p265, %p266
      %p268 = scmp.ne.s32.totalorder %s257, %s258
      %p269 = scmp.eq.s32.totalorder %s27, 0
      %p270 = por %p268, %p269
      %p271 = scmp.ne.s32.totalorder %s257, %s258
      %p272 = scmp.eq.s32.totalorder %s28, 1
      %p273 = por %p271, %p272
      %p275 = scmp.ne.s32.totalorder %s258, %s274
      %p276 = scmp.eq.s32.totalorder %s28, 0
      %p277 = por %p275, %p276
      %s278 = ssub.s32 %s29, %s41
      %s279 = ssub.s32 %s30, %s37
      %s280 = sor.u32 %s278, %s279
      %p281 = scmp.eq.s32.totalorder %s280, 0
      %s283 = sadd.s32 %s282, 1
      %s284 = scalar_select %p281, %s282, %s283
      %p287 = pneg %p281
      %p288 = scmp.eq.s32.totalorder %s22, 1
      %p289 = por %p287, %p288
      %p290 = scmp.ne.s32.totalorder %s282, %s285
      %p291 = scmp.eq.s32.totalorder %s22, 0
      %p292 = por %p290, %p291
      %p293 = scmp.ne.s32.totalorder %s282, %s285
      %p294 = scmp.eq.s32.totalorder %s27, 1
      %p295 = por %p293, %p294
      %p296 = scmp.ne.s32.totalorder %s285, %s286
      %p297 = scmp.eq.s32.totalorder %s27, 0
      %p298 = por %p296, %p297
      %p299 = scmp.ne.s32.totalorder %s285, %s286
      %p300 = scmp.eq.s32.totalorder %s28, 1
      %p301 = por %p299, %p300
      %p303 = scmp.ne.s32.totalorder %s286, %s302
      %p304 = scmp.eq.s32.totalorder %s28, 0
      %p305 = por %p303, %p304
      %p306 = scmp.le.s32.totalorder 1, %s22
      %p307 = scmp.lt.s32.totalorder %s22, 3
      %p308 = pnand %p306, %p307
      %p309 = pneg %p308
      // Predicated region
      $region9: #{tpu_custom_call.1} parent=5 // pred_check
        _
      $region10: #{tpu_custom_call.1} parent=5 // pred_check_branch
        %311 = sbr.rel (%p308) target = $region12
      $region11: #{tpu_custom_call.1} parent=5 // pred_region
        %s312 = ssub.s32 %s22, 1
        // Predicated region
        $region13: #{tpu_custom_call.1} parent=11 // pred_check
          %p313 = pneg %p60
        $region14: #{tpu_custom_call.1} parent=11 // pred_check_branch
          %315 = sbr.rel (%p313) target = $region16
        $region15: #{tpu_custom_call.1} parent=11 // pred_region
          %p316 = scmp.lt.s32.totalorder %s31, 0
          %s317 = scalar_select %p316, %s31, 0
          %s318 = smul.addr %s317, 8
          %s319 = scalar_lea.vmem %s0, %s318
        $region16: #{tpu_custom_call.1} parent=11 // pred_fallthru
          _
        // Predicated region
        $region17: #{tpu_custom_call.1} parent=11 // pred_check
          %p320 = pneg %p86
        $region18: #{tpu_custom_call.1} parent=11 // pred_check_branch
          %322 = sbr.rel (%p320) target = $region20
        $region19: #{tpu_custom_call.1} parent=11 // pred_region
          %p323 = scmp.lt.s32.totalorder %s31, 0
          %s324 = scalar_select %p323, %s31, 0
          %s325 = smul.addr %s324, 8
          %s326 = scalar_lea.vmem %s1, %s325
        $region20: #{tpu_custom_call.1} parent=11 // pred_fallthru
          _
        // Predicated region
        $region21: #{tpu_custom_call.1} parent=11 // pred_check
          %p327 = pneg %p112
        $region22: #{tpu_custom_call.1} parent=11 // pred_check_branch
          %329 = sbr.rel (%p327) target = $region24
        $region23: #{tpu_custom_call.1} parent=11 // pred_region
          %p330 = scmp.lt.s32.totalorder %s31, 0
          %s331 = scalar_select %p330, %s31, 0
          %s332 = smul.addr %s331, 8
          %s333 = scalar_lea.vmem %s2, %s332
        $region24: #{tpu_custom_call.1} parent=11 // pred_fallthru
          _
        // Predicated region
        $region25: #{tpu_custom_call.1} parent=11 // pred_check
          %p334 = pneg %p138
        $region26: #{tpu_custom_call.1} parent=11 // pred_check_branch
          %336 = sbr.rel (%p334) target = $region28
        $region27: #{tpu_custom_call.1} parent=11 // pred_region
          %p337 = scmp.lt.s32.totalorder %s31, 0
          %s338 = scalar_select %p337, %s31, 0
          %s339 = smul.addr %s338, 8
          %s340 = scalar_lea.vmem %s3, %s339
        $region28: #{tpu_custom_call.1} parent=11 // pred_fallthru
          _
        // Predicated region
        $region29: #{tpu_custom_call.1} parent=11 // pred_check
          %p341 = pneg %p164
        $region30: #{tpu_custom_call.1} parent=11 // pred_check_branch
          %343 = sbr.rel (%p341) target = $region32
        $region31: #{tpu_custom_call.1} parent=11 // pred_region
          %p344 = scmp.lt.s32.totalorder %s31, 0
          %s345 = scalar_select %p344, %s31, 0
          %s346 = smul.addr %s345, 8
          %s347 = scalar_lea.vmem %s4, %s346
        $region32: #{tpu_custom_call.1} parent=11 // pred_fallthru
          _
        // Predicated region
        $region33: #{tpu_custom_call.1} parent=11 // pred_check
          %p348 = pneg %p190
        $region34: #{tpu_custom_call.1} parent=11 // pred_check_branch
          %350 = sbr.rel (%p348) target = $region36
        $region35: #{tpu_custom_call.1} parent=11 // pred_region
          %p351 = scmp.lt.s32.totalorder %s31, 0
          %s352 = scalar_select %p351, %s31, 0
          %s353 = smul.addr %s352, 8
          %s354 = scalar_lea.vmem %s5, %s353
        $region36: #{tpu_custom_call.1} parent=11 // pred_fallthru
          _
        // Predicated region
        $region37: #{tpu_custom_call.1} parent=11 // pred_check
          %p355 = pneg %p216
        $region38: #{tpu_custom_call.1} parent=11 // pred_check_branch
          %357 = sbr.rel (%p355) target = $region40
        $region39: #{tpu_custom_call.1} parent=11 // pred_region
          %p358 = scmp.lt.s32.totalorder %s31, 0
          %s359 = scalar_select %p358, %s31, 0
          %s360 = smul.addr %s359, 8
          %s361 = scalar_lea.vmem %s6, %s360
        $region40: #{tpu_custom_call.1} parent=11 // pred_fallthru
          _
      $region12: #{tpu_custom_call.1} parent=5 // pred_fallthru
        _
      %p362 = scmp.lt.s32.totalorder %s22, 2
      // Predicated region
      $region41: #{tpu_custom_call.1} parent=5 // pred_check
        %p363 = pneg %p362
      $region42: #{tpu_custom_call.1} parent=5 // pred_check_branch
        %365 = sbr.rel (%p363) target = $region44
      $region43: #{tpu_custom_call.1} parent=5 // pred_region
        // Predicated region
        $region45: #{tpu_custom_call.1} parent=43 // pred_check
          %p366 = pneg %p236
        $region46: #{tpu_custom_call.1} parent=43 // pred_check_branch
          %368 = sbr.rel (%p366) target = $region48
        $region47: #{tpu_custom_call.1} parent=43 // pred_region
          %p369 = scmp.lt.s32.totalorder %s30, 1
          %s370 = scalar_select %p369, %s30, 1
          %s371 = scalar_lea.vmem %s7, %s370
        $region48: #{tpu_custom_call.1} parent=43 // pred_fallthru
          _
      $region44: #{tpu_custom_call.1} parent=5 // pred_fallthru
        _
      %p372 = scmp.le.s32.totalorder 1, %s22
      %p373 = scmp.lt.s32.totalorder %s22, 3
      %p374 = pnand %p372, %p373
      %p375 = pneg %p374
      // Predicated region
      $region49: #{tpu_custom_call.1} parent=5 // pred_check
        _
      $region50: #{tpu_custom_call.1} parent=5 // pred_check_branch
        %377 = sbr.rel (%p374) target = $region52
      $region51: #{tpu_custom_call.1} parent=5 // pred_region
        %s378 = ssub.s32 %s22, 1
        %p379 = scmp.lt.s32.totalorder %s31, 0
        %s380 = scalar_select %p379, %s31, 0
        %s381 = smul.addr %s380, 8
        %s382 = scalar_lea.vmem %s0, %s381
        %p383 = pneg %p60
        %p384 = pneg %p57
        %p385 = scmp.lt.s32.totalorder %s31, 0
        %s386 = scalar_select %p385, %s31, 0
        %s387 = smul.addr %s386, 8
        %s388 = scalar_lea.vmem %s1, %s387
        %p389 = pneg %p86
        %p390 = pneg %p83
        %p391 = scmp.lt.s32.totalorder %s31, 0
        %s392 = scalar_select %p391, %s31, 0
        %s393 = smul.addr %s392, 8
        %s394 = scalar_lea.vmem %s2, %s393
        %p395 = pneg %p112
        %p396 = pneg %p109
        %p397 = scmp.lt.s32.totalorder %s31, 0
        %s398 = scalar_select %p397, %s31, 0
        %s399 = smul.addr %s398, 8
        %s400 = scalar_lea.vmem %s3, %s399
        %p401 = pneg %p138
        %p402 = pneg %p135
        %p403 = scmp.lt.s32.totalorder %s31, 0
        %s404 = scalar_select %p403, %s31, 0
        %s405 = smul.addr %s404, 8
        %s406 = scalar_lea.vmem %s4, %s405
        %p407 = pneg %p164
        %p408 = pneg %p161
        %p409 = scmp.lt.s32.totalorder %s31, 0
        %s410 = scalar_select %p409, %s31, 0
        %s411 = smul.addr %s410, 8
        %s412 = scalar_lea.vmem %s5, %s411
        %p413 = pneg %p190
        %p414 = pneg %p187
        %p415 = scmp.lt.s32.totalorder %s31, 0
        %s416 = scalar_select %p415, %s31, 0
        %s417 = smul.addr %s416, 8
        %s418 = scalar_lea.vmem %s6, %s417
        %p419 = pneg %p216
        %p420 = pneg %p213
        %p421 = scmp.lt.s32.totalorder %s32, 1
        %s422 = scalar_select %p421, %s32, 1
        %s423 = scalar_lea.vmem %s7, %s422
        %p424 = pneg %p242
        %p425 = pneg %p239
        %p426 = pneg %p270
        %p427 = pneg %p267
        %s428 = sand.u32 %s257, 1
        %s429 = scalar_lea.sflag [#allocation3], %s428
        %s430 = sand.u32 %s257, 1
        %s431 = smul.addr %s430, 8
        %s432 = scalar_lea.vmem [#allocation2], %s431
        %p433 = pneg %p298
        %p434 = pneg %p295
        %s435 = sand.u32 %s285, 1
        %s436 = scalar_lea.sflag [#allocation5], %s435
        %s437 = sand.u32 %s285, 1
        %s438 = smul.addr %s437, 8
        %s439 = scalar_lea.vmem [#allocation4], %s438
        %p440 = scmp.lt.s32.totalorder %s31, 0
        %s441 = scalar_select %p440, %s31, 0
        %s442 = smul.addr %s441, 8
        %s443 = scalar_lea.vmem %s0, %s442
        %p444 = scmp.lt.s32.totalorder %s31, 0
        %s445 = scalar_select %p444, %s31, 0
        %s446 = smul.addr %s445, 8
        %s447 = scalar_lea.vmem %s1, %s446
        %p448 = scmp.lt.s32.totalorder %s31, 0
        %s449 = scalar_select %p448, %s31, 0
        %s450 = smul.addr %s449, 8
        %s451 = scalar_lea.vmem %s2, %s450
        %p452 = scmp.lt.s32.totalorder %s31, 0
        %s453 = scalar_select %p452, %s31, 0
        %s454 = smul.addr %s453, 8
        %s455 = scalar_lea.vmem %s3, %s454
        %p456 = scmp.lt.s32.totalorder %s31, 0
        %s457 = scalar_select %p456, %s31, 0
        %s458 = smul.addr %s457, 8
        %s459 = scalar_lea.vmem %s4, %s458
        %p460 = scmp.lt.s32.totalorder %s31, 0
        %s461 = scalar_select %p460, %s31, 0
        %s462 = smul.addr %s461, 8
        %s463 = scalar_lea.vmem %s5, %s462
        %p464 = scmp.lt.s32.totalorder %s31, 0
        %s465 = scalar_select %p464, %s31, 0
        %s466 = smul.addr %s465, 8
        %s467 = scalar_lea.vmem %s6, %s466
        %p468 = scmp.lt.s32.totalorder %s32, 1
        %s469 = scalar_select %p468, %s32, 1
        %s470 = scalar_lea.vmem %s7, %s469
        %v471 = vld [vmem:[%s443] sm:$0xff]
        %v472 = vld [vmem:[%s447] sm:$0xff]
        %v473 = vld [vmem:[%s451] sm:$0xff]
        %v474 = vld [vmem:[%s455] sm:$0xff]
        %v475 = vld [vmem:[%s459] sm:$0xff]
        %v476 = vld [vmem:[%s463] sm:$0xff]
        %v477 = vld [vmem:[%s467] sm:$0xff]
        %v478 = vlaneseq
        %v479 = vand.u32 %v478, 127
        %v480 = vcvt.s32.f32 %v479
        %s481 = smul.u32 %s32, 128
        %s482 = scvt.s32.f32 %s481
        %v483 = vmul.f32 %v480, 128.0
        %v484 = vstv %s482
        %v485 = vadd.f32 %v484, %v483
        %v486 = vmul.f32 %v485, 0.0078125
        %v487 = vadd.f32 %v486, -1.0
        %v488 = vmul.f32 %v472, %v487
        %v489 = vmul.f32 %v472, 4097.0
        %v490 = vsub.f32 %v489, %v472
        %v491 = vsub.f32 %v489, %v490
        %v492 = vsub.f32 %v472, %v491
        %v493 = vmul.f32 %v487, 4097.0
        %v494 = vsub.f32 %v493, %v487
        %v495 = vsub.f32 %v493, %v494
        %v496 = vsub.f32 %v487, %v495
        %v497 = vmul.f32 %v491, %v495
        %v498 = vsub.f32 %v497, %v488
        %v499 = vmul.f32 %v491, %v496
        %v500 = vadd.f32 %v498, %v499
        %v501 = vmul.f32 %v492, %v495
        %v502 = vadd.f32 %v500, %v501
        %v503 = vmul.f32 %v492, %v496
        %v504 = vadd.f32 %v502, %v503
        %v505 = vsub.f32 0.0, %v473
        %v506 = vadd.f32 %v488, %v505
        %v507 = vsub.f32 %v506, %v488
        %v508 = vsub.f32 %v506, %v507
        %v509 = vsub.f32 %v488, %v508
        %v510 = vsub.f32 %v505, %v507
        %v511 = vadd.f32 %v509, %v510
        %v512 = vadd.f32 %v504, %v511
        %v513 = vmul.f32 %v506, 0.15915494
        %v514 = vadd.f32 %v513, 0.5
        %v515 = vfloor.f32 %v514
        %v516 = vmul.f32 %v515, 6.28125
        %v517 = vsub.f32 %v506, %v516
        %v518 = vmul.f32 %v515, 0.0019353072
        %v519 = vsub.f32 %v517, %v518
        %v520 = vand.u32 2147483647, %v519
        %vm521 = vcmp.le.f32.partialorder %v520, 0.7853982
        %vm522 = vcmp.lt.s32.totalorder %v519, 0
        %v523 = vand.u32 %v519, 2139095040
        %v524 = vshrl.u32 %v523, 23
        %v525 = vsub.s32 %v524, 127
        %v526 = vand.u32 2147483647, %v519
        %v527 = vand.u32 %v526, 8388607
        %v528 = vor.u32 %v527, 8388608
        %v529 = vsub.s32 0, %v528
        %v530 = vadd.s32 %v525, 1
        %vm531 = vcmp.gt.s32.totalorder %v530, 0
        %v532 = vsel %vm531, %v530, 0
        %v533 = vshrl.u32 %v532, 5
        %v534 = vand.u32 %v532, 31
        %v535 = vsub.s32 32, %v534
        %v536 = vshrl.u32 683565275, %v535
        %v537 = vshll.u32 683565275, %v534
        %v538 = vshrl.u32 2475754826, %v535
        %v539 = vor.u32 %v537, %v538
        %v540 = vshll.u32 2475754826, %v534
        %v541 = vshrl.u32 2131351028, %v535
        %v542 = vor.u32 %v540, %v541
        %v543 = vshll.u32 2131351028, %v534
        %v544 = vshrl.u32 2102212464, %v535
        %v545 = vor.u32 %v543, %v544
        %v546 = vshll.u32 2102212464, %v534
        %v547 = vshrl.u32 920167782, %v535
        %v548 = vor.u32 %v546, %v547
        %v549 = vshll.u32 920167782, %v534
        %v550 = vshrl.u32 1326507024, %v535
        %v551 = vor.u32 %v549, %v550
        %vm552 = vcmp.lt.s32.totalorder %v533, 1
        %vm553 = vcmp.lt.s32.totalorder %v533, 2
        %vm554 = vcmp.lt.s32.totalorder %v533, 3
        %vm555 = vcmp.lt.s32.totalorder %v533, 4
        %v556 = vsel %vm552, %v536, %v539
        %v557 = vsel %vm555, %v545, 2102212464
        %v558 = vsel %vm554, %v542, %v557
        %v559 = vsel %vm553, %v556, %v558
        %v560 = vsel %vm552, %v539, %v542
        %v561 = vsel %vm555, %v548, 920167782
        %v562 = vsel %vm554, %v545, %v561
        %v563 = vsel %vm553, %v560, %v562
        %v564 = vsel %vm552, %v542, %v545
        %v565 = vsel %vm555, %v551, 1326507024
        %v566 = vsel %vm554, %v548, %v565
        %v567 = vsel %vm553, %v564, %v566
        %v568 = vshll.u32 %v528, 8
        %v569 = vand.u32 %v568, 65535
        %v570 = vshrl.u32 %v568, 16
        %v571 = vand.u32 %v567, 65535
        %v572 = vshrl.u32 %v567, 16
        %v573 = vmul.u32 %v569, %v571
        %v574 = vmul.u32 %v569, %v572
        %v575 = vmul.u32 %v570, %v571
        %v576 = vmul.u32 %v570, %v572
        %v577 = vshll.u32 %v574, 16
        %v578 = vshrl.u32 %v574, 16
        %v579 = vshll.u32 %v575, 16
        %v580 = vshrl.u32 %v575, 16
        %vm581 = vc.u32 %v573, %v577
        %v582 = vsel %vm581, 1, 0
        %v583 = vadd.s32 %v573, %v577
        %v584 = vadd.s32 %v576, %v582
        %vm585 = vc.u32 %v583, %v579
        %v586 = vsel %vm585, 1, 0
        %v587 = vadd.s32 %v583, %v579
        %v588 = vadd.s32 %v584, %v586
        %v589 = vadd.s32 %v588, %v578
        %v590 = vadd.s32 %v589, %v580
        %v591 = vand.u32 %v568, 65535
        %v592 = vshrl.u32 %v568, 16
        %v593 = vand.u32 %v563, 65535
        %v594 = vshrl.u32 %v563, 16
        %v595 = vmul.u32 %v591, %v593
        %v596 = vmul.u32 %v591, %v594
        %v597 = vmul.u32 %v592, %v593
        %v598 = vmul.u32 %v592, %v594
        %v599 = vshll.u32 %v596, 16
        %v600 = vshrl.u32 %v596, 16
        %v601 = vshll.u32 %v597, 16
        %v602 = vshrl.u32 %v597, 16
        %vm603 = vc.u32 %v595, %v599
        %v604 = vsel %vm603, 1, 0
        %v605 = vadd.s32 %v595, %v599
        %v606 = vadd.s32 %v598, %v604
        %vm607 = vc.u32 %v605, %v601
        %v608 = vsel %vm607, 1, 0
        %v609 = vadd.s32 %v605, %v601
        %v610 = vadd.s32 %v606, %v608
        %v611 = vadd.s32 %v610, %v600
        %v612 = vadd.s32 %v611, %v602
        %v613 = vmul.u32 %v568, %v559
        %v614 = vadd.s32 %v590, %v609
        %vm615 = vc.u32 %v590, %v609
        %v616 = vadd.s32 %v612, 1
        %v617 = vsel %vm615, %v616, %v612
        %v618 = vadd.s32 %v613, %v617
        %v619 = vadd.s32 %v618, 536870912
        %v620 = vshrl.u32 %v619, 30
        %v621 = vshll.u32 %v620, 30
        %v622 = vsub.s32 %v618, %v621
        %vm623 = vcmp.lt.s32.totalorder %v622, 0
        %v624 = vsub.s32 0, %v622
        %v625 = vsel %vm623, %v624, %v622
        %v626 = vclz %v625
        %v627 = vsub.s32 %v626, 2
        %vm628 = vcmp.gt.s32.totalorder 0, %v627
        %v629 = vsel %vm628, 0, %v627
        %v630 = vsub.s32 32, %v629
        %v631 = vshll.u32 %v622, %v629
        %v632 = vshrl.u32 %v614, %v630
        %v633 = vor.u32 %v631, %v632
        %v634 = vsub.s32 4294967266, %v629
        %v635 = vadd.s32 %v634, 127
        %v636 = vshll.u32 %v635, 23
        %v637 = vor.u32 4788187, %v636
        %v638 = vand.u32 2147483647, %v637
        %v640 = vcvt.s32.f32 %v633
        %v641 = vmul.f32 %v640, %v638
        %v642 = vxor.u32 %v641, 2147483648
        %v643 = vsel %vm522, %v642, %v641
        %v644 = vsub.s32 4, %v620
        %v645 = vsel %vm522, %v644, %v620
        %v646 = vsel %vm521, %v519, %v643
        %v647 = vsel %vm521, 0, %v645
        %v648 = vmul.f32 %v646, %v646
        %v649 = vmul.f32 %v648, -0.001358992
        %v650 = vadd.f32 %v649, 0.041655596
        %v651 = vmul.f32 %v648, %v650
        %v652 = vadd.f32 %v651, -0.4999988
        %v653 = vmul.f32 %v648, %v652
        %v654 = vadd.f32 1.0, %v653
        %v655 = vmul.f32 %v646, %v646
        %v656 = vmul.f32 %v655, -0.00019511016
        %v657 = vadd.f32 %v656, 0.008332121
        %v658 = vmul.f32 %v655, %v657
        %v659 = vadd.f32 %v658, -0.16666654
        %v660 = vmul.f32 %v655, %v659
        %v661 = vadd.f32 %v660, 1.0
        %v662 = vmul.f32 %v661, %v646
        %vm663 = vweird.f32 %v519
        %v664 = vadd.s32 %v647, 3
        %v665 = vand.u32 %v664, 3
        %vm666 = vcmp.lt.s32.totalorder %v665, 2
        %vm667 = vcmp.eq.s32.totalorder %v665, 0
        %v668 = vxor.u32 %v662, 2147483648
        %v669 = vsel %vm667, %v654, %v668
        %vm670 = vcmp.eq.s32.totalorder %v665, 2
        %v671 = vxor.u32 %v654, 2147483648
        %v672 = vsel %vm670, %v671, %v662
        %v673 = vsel %vm666, %v669, %v672
        %v674 = vsel %vm663, nan, %v673
        %v675 = vand.u32 2147483647, %v519
        %vm676 = vcmp.le.f32.partialorder %v675, 0.7853982
        %vm677 = vcmp.lt.s32.totalorder %v519, 0
        %v678 = vand.u32 %v519, 2139095040
        %v679 = vshrl.u32 %v678, 23
        %v680 = vsub.s32 %v679, 127
        %v681 = vand.u32 2147483647, %v519
        %v682 = vand.u32 %v681, 8388607
        %v683 = vor.u32 %v682, 8388608
        %v684 = vsub.s32 0, %v683
        %v685 = vadd.s32 %v680, 1
        %vm686 = vcmp.gt.s32.totalorder %v685, 0
        %v687 = vsel %vm686, %v685, 0
        %v688 = vshrl.u32 %v687, 5
        %v689 = vand.u32 %v687, 31
        %v690 = vsub.s32 32, %v689
        %v691 = vshrl.u32 683565275, %v690
        %v692 = vshll.u32 683565275, %v689
        %v693 = vshrl.u32 2475754826, %v690
        %v694 = vor.u32 %v692, %v693
        %v695 = vshll.u32 2475754826, %v689
        %v696 = vshrl.u32 2131351028, %v690
        %v697 = vor.u32 %v695, %v696
        %v698 = vshll.u32 2131351028, %v689
        %v699 = vshrl.u32 2102212464, %v690
        %v700 = vor.u32 %v698, %v699
        %v701 = vshll.u32 2102212464, %v689
        %v702 = vshrl.u32 920167782, %v690
        %v703 = vor.u32 %v701, %v702
        %v704 = vshll.u32 920167782, %v689
        %v705 = vshrl.u32 1326507024, %v690
        %v706 = vor.u32 %v704, %v705
        %vm707 = vcmp.lt.s32.totalorder %v688, 1
        %vm708 = vcmp.lt.s32.totalorder %v688, 2
        %vm709 = vcmp.lt.s32.totalorder %v688, 3
        %vm710 = vcmp.lt.s32.totalorder %v688, 4
        %v711 = vsel %vm707, %v691, %v694
        %v712 = vsel %vm710, %v700, 2102212464
        %v713 = vsel %vm709, %v697, %v712
        %v714 = vsel %vm708, %v711, %v713
        %v715 = vsel %vm707, %v694, %v697
        %v716 = vsel %vm710, %v703, 920167782
        %v717 = vsel %vm709, %v700, %v716
        %v718 = vsel %vm708, %v715, %v717
        %v719 = vsel %vm707, %v697, %v700
        %v720 = vsel %vm710, %v706, 1326507024
        %v721 = vsel %vm709, %v703, %v720
        %v722 = vsel %vm708, %v719, %v721
        %v723 = vshll.u32 %v683, 8
        %v724 = vand.u32 %v723, 65535
        %v725 = vshrl.u32 %v723, 16
        %v726 = vand.u32 %v722, 65535
        %v727 = vshrl.u32 %v722, 16
        %v728 = vmul.u32 %v724, %v726
        %v729 = vmul.u32 %v724, %v727
        %v730 = vmul.u32 %v725, %v726
        %v731 = vmul.u32 %v725, %v727
        %v732 = vshll.u32 %v729, 16
        %v733 = vshrl.u32 %v729, 16
        %v734 = vshll.u32 %v730, 16
        %v735 = vshrl.u32 %v730, 16
        %vm736 = vc.u32 %v728, %v732
        %v737 = vsel %vm736, 1, 0
        %v738 = vadd.s32 %v728, %v732
        %v739 = vadd.s32 %v731, %v737
        %vm740 = vc.u32 %v738, %v734
        %v741 = vsel %vm740, 1, 0
        %v742 = vadd.s32 %v738, %v734
        %v743 = vadd.s32 %v739, %v741
        %v744 = vadd.s32 %v743, %v733
        %v745 = vadd.s32 %v744, %v735
        %v746 = vand.u32 %v723, 65535
        %v747 = vshrl.u32 %v723, 16
        %v748 = vand.u32 %v718, 65535
        %v749 = vshrl.u32 %v718, 16
        %v750 = vmul.u32 %v746, %v748
        %v751 = vmul.u32 %v746, %v749
        %v752 = vmul.u32 %v747, %v748
        %v753 = vmul.u32 %v747, %v749
        %v754 = vshll.u32 %v751, 16
        %v755 = vshrl.u32 %v751, 16
        %v756 = vshll.u32 %v752, 16
        %v757 = vshrl.u32 %v752, 16
        %vm758 = vc.u32 %v750, %v754
        %v759 = vsel %vm758, 1, 0
        %v760 = vadd.s32 %v750, %v754
        %v761 = vadd.s32 %v753, %v759
        %vm762 = vc.u32 %v760, %v756
        %v763 = vsel %vm762, 1, 0
        %v764 = vadd.s32 %v760, %v756
        %v765 = vadd.s32 %v761, %v763
        %v766 = vadd.s32 %v765, %v755
        %v767 = vadd.s32 %v766, %v757
        %v768 = vmul.u32 %v723, %v714
        %v769 = vadd.s32 %v745, %v764
        %vm770 = vc.u32 %v745, %v764
        %v771 = vadd.s32 %v767, 1
        %v772 = vsel %vm770, %v771, %v767
        %v773 = vadd.s32 %v768, %v772
        %v774 = vadd.s32 %v773, 536870912
        %v775 = vshrl.u32 %v774, 30
        %v776 = vshll.u32 %v775, 30
        %v777 = vsub.s32 %v773, %v776
        %vm778 = vcmp.lt.s32.totalorder %v777, 0
        %v779 = vsub.s32 0, %v777
        %v780 = vsel %vm778, %v779, %v777
        %v781 = vclz %v780
        %v782 = vsub.s32 %v781, 2
        %vm783 = vcmp.gt.s32.totalorder 0, %v782
        %v784 = vsel %vm783, 0, %v782
        %v785 = vsub.s32 32, %v784
        %v786 = vshll.u32 %v777, %v784
        %v787 = vshrl.u32 %v769, %v785
        %v788 = vor.u32 %v786, %v787
        %v789 = vsub.s32 4294967266, %v784
        %v790 = vadd.s32 %v789, 127
        %v791 = vshll.u32 %v790, 23
        %v792 = vor.u32 4788187, %v791
        %v793 = vand.u32 2147483647, %v792
        %v795 = vcvt.s32.f32 %v788
        %v796 = vmul.f32 %v795, %v793
        %v797 = vxor.u32 %v796, 2147483648
        %v798 = vsel %vm677, %v797, %v796
        %v799 = vsub.s32 4, %v775
        %v800 = vsel %vm677, %v799, %v775
        %v801 = vsel %vm676, %v519, %v798
        %v802 = vsel %vm676, 0, %v800
        %v803 = vmul.f32 %v801, %v801
        %v804 = vmul.f32 %v803, -0.001358992
        %v805 = vadd.f32 %v804, 0.041655596
        %v806 = vmul.f32 %v803, %v805
        %v807 = vadd.f32 %v806, -0.4999988
        %v808 = vmul.f32 %v803, %v807
        %v809 = vadd.f32 1.0, %v808
        %v810 = vmul.f32 %v801, %v801
        %v811 = vmul.f32 %v810, -0.00019511016
        %v812 = vadd.f32 %v811, 0.008332121
        %v813 = vmul.f32 %v810, %v812
        %v814 = vadd.f32 %v813, -0.16666654
        %v815 = vmul.f32 %v810, %v814
        %v816 = vadd.f32 %v815, 1.0
        %v817 = vmul.f32 %v816, %v801
        %vm818 = vweird.f32 %v519
        %v819 = vand.u32 %v802, 3
        %vm820 = vcmp.lt.s32.totalorder %v819, 2
        %vm821 = vcmp.eq.s32.totalorder %v819, 0
        %v822 = vxor.u32 %v817, 2147483648
        %v823 = vsel %vm821, %v809, %v822
        %vm824 = vcmp.eq.s32.totalorder %v819, 2
        %v825 = vxor.u32 %v809, 2147483648
        %v826 = vsel %vm824, %v825, %v817
        %v827 = vsel %vm820, %v823, %v826
        %v828 = vsel %vm818, nan, %v827
        %v829 = vmul.f32 %v512, %v828
        %v830 = vadd.f32 %v674, %v829
        %v831 = vmul.f32 %v512, %v674
        %v832 = vsub.f32 %v828, %v831
        %v833 = vmul.f32 %v830, %v474
        %v834 = vmul.f32 %v832, %v474
        %v835 = vmul.f32 %v830, %v475
        %v836 = vmul.f32 %v832, %v475
        %v837 = vld [vmem:[%s470] sm:$0x1]
        %839 = vset.pattern.permute.xlu0 0
        %840 = vperm.xlu0 %839, %v471
        %v841 = vpop.permute.xlu0 %840
        %v844 = vperm.slane %v837, 0
        %v846 = vmul.f32 %v841, %v844
        %v847 = vmul.f32 %v846, 1.442695
        %v848 = vpow.pop %v847
        %850 = vset.pattern.permute.xlu0 0
        %851 = vperm.xlu0 %850, %v833
        %v852 = vpop.permute.xlu0 %851
        %v854 = vmul.f32 %v852, %v477
        %856 = vset.pattern.permute.xlu0 0
        %857 = vperm.xlu0 %856, %v834
        %v858 = vpop.permute.xlu0 %857
        %v860 = vmul.f32 %v858, %v476
        %v861 = vadd.f32 %v854, %v860
        %v862 = vmul.f32 %v848, %v861
        %863 = vst [vmem:[%s432] sm:$0xff] %v862
        %865 = vset.pattern.permute.xlu0 0
        %866 = vperm.xlu0 %865, %v836
        %v867 = vpop.permute.xlu0 %866
        %v869 = vmul.f32 %v867, %v477
        %871 = vset.pattern.permute.xlu0 0
        %872 = vperm.xlu0 %871, %v835
        %v873 = vpop.permute.xlu0 %872
        %v875 = vmul.f32 %v873, %v476
        %v876 = vsub.f32 %v869, %v875
        %v877 = vmul.f32 %v848, %v876
        %878 = vst [vmem:[%s439] sm:$0xff] %v877
        %s879 = sand.u32 %s257, 1
        %s880 = scalar_lea.sflag [#allocation3], %s879
        %s881 = sand.u32 %s257, 1
        %s882 = smul.addr %s881, 8
        %s883 = scalar_lea.vmem [#allocation2], %s882
        %s884 = sand.u32 %s285, 1
        %s885 = scalar_lea.sflag [#allocation5], %s884
        %s886 = sand.u32 %s285, 1
        %s887 = smul.addr %s886, 8
        %s888 = scalar_lea.vmem [#allocation4], %s887
        // Predicated region
        $region53: #{tpu_custom_call.1} parent=51 // pred_check
          %p889 = pneg %p267
        $region54: #{tpu_custom_call.1} parent=51 // pred_check_branch
          %891 = sbr.rel (%p889) target = $region56
        $region55: #{tpu_custom_call.1} parent=51 // pred_region
          %893 = vsyncadd %s880, 0
          %s894 = smul.addr %s31, 2
          %s895 = sadd.s32 %s32, %s894
          %s896 = smul.addr %s895, 8
          %s897 = scalar_lea.hbm %s8, %s896
          %s899 = sshll.u32 %s883, 4
          %s900 = int_to_ptr.vmem [resolvable:$true] %s899
          %s901 = sshll.u32 %s897, 4
          %s902 = int_to_ptr.hbm [resolvable:$true] %s901
          %904 = dma.vmem_to_hbm [thread:$0]  %s900, 128, %s902, %s880
        $region56: #{tpu_custom_call.1} parent=51 // pred_fallthru
          _
        // Predicated region
        $region57: #{tpu_custom_call.1} parent=51 // pred_check
          %p905 = pneg %p295
        $region58: #{tpu_custom_call.1} parent=51 // pred_check_branch
          %907 = sbr.rel (%p905) target = $region60
        $region59: #{tpu_custom_call.1} parent=51 // pred_region
          %909 = vsyncadd %s885, 0
          %s910 = smul.addr %s31, 2
          %s911 = sadd.s32 %s32, %s910
          %s912 = smul.addr %s911, 8
          %s913 = scalar_lea.hbm %s9, %s912
          %s915 = sshll.u32 %s888, 4
          %s916 = int_to_ptr.vmem [resolvable:$true] %s915
          %s917 = sshll.u32 %s913, 4
          %s918 = int_to_ptr.hbm [resolvable:$true] %s917
          %920 = dma.vmem_to_hbm [thread:$0]  %s916, 128, %s918, %s885
        $region60: #{tpu_custom_call.1} parent=51 // pred_fallthru
          _
      $region52: #{tpu_custom_call.1} parent=5 // pred_fallthru
        _
      %p921 = scmp.le.s32.totalorder 2, %s22
      // Predicated region
      $region61: #{tpu_custom_call.1} parent=5 // pred_check
        %p922 = pneg %p921
      $region62: #{tpu_custom_call.1} parent=5 // pred_check_branch
        %924 = sbr.rel (%p922) target = $region64
      $region63: #{tpu_custom_call.1} parent=5 // pred_region
        %s925 = ssub.s32 %s22, 2
        // Predicated region
        $region65: #{tpu_custom_call.1} parent=63 // pred_check
          %p926 = pneg %p273
        $region66: #{tpu_custom_call.1} parent=63 // pred_check_branch
          %928 = sbr.rel (%p926) target = $region68
        $region67: #{tpu_custom_call.1} parent=63 // pred_region
          %s929 = sand.u32 %s258, 1
          %s930 = scalar_lea.sflag [#allocation3], %s929
          %s931 = sand.u32 %s258, 1
          %s932 = smul.addr %s931, 8
          %s933 = scalar_lea.vmem [#allocation2], %s932
          %935 = dma.done %s930, 128
        $region68: #{tpu_custom_call.1} parent=63 // pred_fallthru
          _
        // Predicated region
        $region69: #{tpu_custom_call.1} parent=63 // pred_check
          %p936 = pneg %p301
        $region70: #{tpu_custom_call.1} parent=63 // pred_check_branch
          %938 = sbr.rel (%p936) target = $region72
        $region71: #{tpu_custom_call.1} parent=63 // pred_region
          %s939 = sand.u32 %s286, 1
          %s940 = scalar_lea.sflag [#allocation5], %s939
          %s941 = sand.u32 %s286, 1
          %s942 = smul.addr %s941, 8
          %s943 = scalar_lea.vmem [#allocation4], %s942
          %945 = dma.done %s940, 128
        $region72: #{tpu_custom_call.1} parent=63 // pred_fallthru
          _
      $region64: #{tpu_custom_call.1} parent=5 // pred_fallthru
        _
    $region6: #{tpu_custom_call.1} parent=1 // loop_footer
      %s26 = sadd.s32 1, %s22
    $region7: #{tpu_custom_call.1} parent=1 // loop_footer_branch
      %21 = sbr.rel target = $region3
    $region8: #{tpu_custom_call.1} parent=1 // loop_exit
      _
    %946 = vsyncpa [#allocation3], 1
    %s947 = scalar_lea.sflag [#allocation3], 1
    %948 = vsyncpa %s947, 1
    %949 = vsyncpa [#allocation5], 1
    %s950 = scalar_lea.sflag [#allocation5], 1
    %951 = vsyncpa %s950, 1

</llo_original>
